<compile_context>
chip_gen: v7x
topology: tpu7x:2x2x1
jax: 0.10.0
libtpu: 0.0.40
codegen_flags: <defaults>
</compile_context>

<pallas_src>
import functools

import jax
import jax.numpy as jnp
import numpy as np
from jax.experimental import pallas as pl
from jax.experimental.pallas import tpu as pltpu

_LANE = 128
_MAX_BLOCK_ROWS = 4096          # 4096 x 128 x f32 = 2 MiB per input tile


def _berhu_kernel(pred_ref, gt_ref, out_ref,
                  max_sc, sum_sc, cnt_sc, c_sc, inv2c_sc, halfc_sc, *, delta):
    phase = pl.program_id(0)
    blk = pl.program_id(1)
    nblk = pl.num_programs(1)

    @pl.when(jnp.logical_and(phase == 0, blk == 0))
    def _init():
        max_sc[...] = jnp.zeros_like(max_sc)
        sum_sc[...] = jnp.zeros_like(sum_sc)
        cnt_sc[...] = jnp.zeros_like(cnt_sc)
        out_ref[...] = jnp.zeros_like(out_ref)

    pred = pred_ref[...].astype(jnp.float32)
    gt = gt_ref[...].astype(jnp.float32)
    mask = gt > 0.0
    err = jnp.abs(pred - gt)
    err_m = jnp.where(mask, err, 0.0)          # masked-out / padded -> 0

    @pl.when(phase == 0)
    def _pass_max():
        # Elementwise (VPU-only) running max + count; the single cross-lane
        # reduce is deferred to the phase-0 -> phase-1 transition.
        max_sc[...] = jnp.maximum(max_sc[...], err_m)
        cnt_sc[...] = cnt_sc[...] + mask.astype(jnp.float32)

    @pl.when(jnp.logical_and(phase == 1, blk == 0))
    def _compute_threshold():
        m = jnp.max(max_sc[...], keepdims=True)        # one XLU reduce, (1, 1)
        c = delta * m
        c_sc[...] = c
        inv2c_sc[...] = 0.5 / c                        # exact, once per kernel
        halfc_sc[...] = 0.5 * c

    @pl.when(phase == 1)
    def _pass_sum():
        c = c_sc[...]                                  # (1, 1) broadcasts
        sq = err_m * err_m * inv2c_sc[...] + halfc_sc[...]   # (e^2 + c^2)/(2c)
        # masked-out elements have err_m == 0 <= c, so they add exactly 0.
        sum_sc[...] = sum_sc[...] + jnp.where(err_m > c, sq, err_m)

    @pl.when(jnp.logical_and(phase == 1, blk == nblk - 1))
    def _finalize():
        s = jnp.sum(sum_sc[...], keepdims=True)        # final XLU reduces
        n = jnp.sum(cnt_sc[...], keepdims=True)
        out_ref[...] = s / n


def berhu_loss(prediction, gt, weight_map=None, delta=0.05,
               max_block_rows=_MAX_BLOCK_ROWS):
    """Matches Berhu_loss.forward; weight_map / mask_intersec are unused there."""
    del weight_map  # unused by the reference forward pass

    pred = prediction[:, 0:1]
    pred_b, gt_b = jnp.broadcast_arrays(pred, gt)      # matches torch broadcasting

    flat_p = pred_b.reshape(-1)
    flat_g = gt_b.reshape(-1)

    n = flat_p.shape[0]
    rows = -(-n // _LANE)
    rows8 = max(8, -(-rows // 8) * 8)
    block_rows = min(max_block_rows, rows8)            # adaptive: small inputs -> 1 block
    rows_pad = -(-rows8 // block_rows) * block_rows
    total = rows_pad * _LANE

    # Pad gt with 0 => padded elements fail (gt > 0) and are ignored.
    # TODO(synk): the tail pad is a wrapper-side copy; it could be removed with
    # a scalar-prefetched element count + in-kernel broadcasted_iota mask.
    flat_p = jnp.pad(flat_p, (0, total - n))
    flat_g = jnp.pad(flat_g, (0, total - n))
    p2 = flat_p.reshape(rows_pad, _LANE)
    g2 = flat_g.reshape(rows_pad, _LANE)
    nblk = rows_pad // block_rows

    # VMEM budget: 2 inputs x 2 pipeline buffers + 3 tile-shaped accumulators.
    tile_in = block_rows * _LANE * (p2.dtype.itemsize + g2.dtype.itemsize)
    acc_bytes = 3 * block_rows * _LANE * 4
    needed = 2 * tile_in + acc_bytes + (8 << 20)       # + headroom
    vmem_limit = int(min(max(needed, 32 << 20), 48 << 20))   # safe on v5e/v6e/v7x

    kernel = functools.partial(_berhu_kernel, delta=float(delta))
    out = pl.pallas_call(
        kernel,
        out_shape=jax.ShapeDtypeStruct((1, 1), jnp.float32),
        grid_spec=pltpu.PrefetchScalarGridSpec(
            num_scalar_prefetch=0,
            grid=(2, nblk),                            # (phase, block)
            in_specs=[
                pl.BlockSpec((block_rows, _LANE), lambda p, i: (i, 0)),
                pl.BlockSpec((block_rows, _LANE), lambda p, i: (i, 0)),
            ],
            out_specs=pl.BlockSpec((1, 1), lambda p, i: (0, 0)),
            scratch_shapes=[
                pltpu.VMEM((block_rows, _LANE), jnp.float32),  # running max
                pltpu.VMEM((block_rows, _LANE), jnp.float32),  # running berhu sum
                pltpu.VMEM((block_rows, _LANE), jnp.float32),  # running count
                pltpu.VMEM((1, 1), jnp.float32),               # c
                pltpu.VMEM((1, 1), jnp.float32),               # 1 / (2c)
                pltpu.VMEM((1, 1), jnp.float32),               # c / 2
            ],
        ),
        compiler_params=pltpu.CompilerParams(
            dimension_semantics=("arbitrary", "arbitrary"),
            vmem_limit_bytes=vmem_limit),
    )(p2, g2)
    return out[0, 0]


def _berhu_ref_numpy(prediction, gt, delta=0.05):
    p = np.asarray(prediction)[:, 0:1]
    g = np.asarray(gt)
    err = np.abs(p - g)
    m = g > 0
    e = err[m]
    c = delta * e.max()
    sq = (e ** 2 + c ** 2) / (2.0 * c)
    return float(np.mean(np.where(e > c, sq, e)))


if __name__ == "__main__":
    key = jax.random.PRNGKey(0)
    k1, k2, k3 = jax.random.split(key, 3)
    prediction = jax.random.normal(k1, (2, 4, 16, 16), dtype=jnp.float32)
    # gt has a mix of positive and non-positive values to exercise the mask
    gt = jax.random.uniform(k2, (2, 1, 16, 16), dtype=jnp.float32,
                            minval=-0.5, maxval=1.5)
    weight_map = jax.random.uniform(k3, (2, 1, 16, 16), dtype=jnp.float32)

    loss = berhu_loss(prediction, gt, weight_map, delta=0.05)
    loss = jax.block_until_ready(loss)

    ref = _berhu_ref_numpy(prediction, gt, delta=0.05)
    assert np.allclose(float(loss), ref, rtol=1e-5, atol=1e-6), (float(loss), ref)
    print("KERNEL_OK")
</pallas_src>

<mosaic_0001>
module attributes {stable_mosaic.version = 11 : i64} {
  func.func @_berhu_kernel(%arg0: i32, %arg1: i32, %arg2: memref<8x128xf32, #tpu.memory_space<vmem>>, %arg3: memref<8x128xf32, #tpu.memory_space<vmem>>, %arg4: memref<1x1xf32, #tpu.memory_space<vmem>>, %arg5: memref<8x128xf32, #tpu.memory_space<vmem>>, %arg6: memref<8x128xf32, #tpu.memory_space<vmem>>, %arg7: memref<8x128xf32, #tpu.memory_space<vmem>>, %arg8: memref<1x1xf32, #tpu.memory_space<vmem>>, %arg9: memref<1x1xf32, #tpu.memory_space<vmem>>, %arg10: memref<1x1xf32, #tpu.memory_space<vmem>>) attributes {dimension_semantics = [#tpu.dimension_semantics<arbitrary>, #tpu.dimension_semantics<arbitrary>], iteration_bounds = array<i64: 2, 1>, scalar_prefetch = 0 : i64, scratch_operands = 6 : i64, tpu.core_type = #tpu.core_type<tc>, window_params = [{transform_indices = @transform_0, window_bounds = array<i64: 8, 128>}, {transform_indices = @transform_1, window_bounds = array<i64: 8, 128>}, {pipeline_mode = #tpu.pipeline_mode<synchronous>, transform_indices = @transform_2, window_bounds = array<i64: 1, 1>}]} {
    %c0_i32 = arith.constant 0 : i32
    %0 = arith.cmpi eq, %arg0, %c0_i32 : i32
    %c0_i32_0 = arith.constant 0 : i32
    %1 = arith.cmpi eq, %arg1, %c0_i32_0 : i32
    %2 = arith.andi %0, %1 : i1
    %3 = arith.extui %2 : i1 to i32
    %c0_i32_1 = arith.constant 0 : i32
    %4 = arith.cmpi ne, %3, %c0_i32_1 : i32
    scf.if %4 {
      %cst_15 = arith.constant 0.000000e+00 : f32
      %29 = vector.broadcast %cst_15 : f32 to vector<8x128xf32>
      %c0_16 = arith.constant 0 : index
      %c0_17 = arith.constant 0 : index
      %30 = vector.load %arg5[%c0_16, %c0_17] : memref<8x128xf32, #tpu.memory_space<vmem>>, vector<8x128xf32>
      tpu.vector_store %arg5[%c0_16, %c0_17], %29 {strides = array<i32>} : memref<8x128xf32, #tpu.memory_space<vmem>>, vector<8x128xf32>,
      %cst_18 = arith.constant 0.000000e+00 : f32
      %31 = vector.broadcast %cst_18 : f32 to vector<8x128xf32>
      %c0_19 = arith.constant 0 : index
      %c0_20 = arith.constant 0 : index
      %32 = vector.load %arg6[%c0_19, %c0_20] : memref<8x128xf32, #tpu.memory_space<vmem>>, vector<8x128xf32>
      tpu.vector_store %arg6[%c0_19, %c0_20], %31 {strides = array<i32>} : memref<8x128xf32, #tpu.memory_space<vmem>>, vector<8x128xf32>,
      %cst_21 = arith.constant 0.000000e+00 : f32
      %33 = vector.broadcast %cst_21 : f32 to vector<8x128xf32>
      %c0_22 = arith.constant 0 : index
      %c0_23 = arith.constant 0 : index
      %34 = vector.load %arg7[%c0_22, %c0_23] : memref<8x128xf32, #tpu.memory_space<vmem>>, vector<8x128xf32>
      tpu.vector_store %arg7[%c0_22, %c0_23], %33 {strides = array<i32>} : memref<8x128xf32, #tpu.memory_space<vmem>>, vector<8x128xf32>,
      %cst_24 = arith.constant 0.000000e+00 : f32
      %35 = vector.broadcast %cst_24 : f32 to vector<1x1xf32>
      %c0_25 = arith.constant 0 : index
      %c0_26 = arith.constant 0 : index
      %36 = vector.load %arg4[%c0_25, %c0_26] : memref<1x1xf32, #tpu.memory_space<vmem>>, vector<1x1xf32>
      tpu.vector_store %arg4[%c0_25, %c0_26], %35 {strides = array<i32>} : memref<1x1xf32, #tpu.memory_space<vmem>>, vector<1x1xf32>,
    } else {
    }
    %c0 = arith.constant 0 : index
    %c0_2 = arith.constant 0 : index
    %5 = vector.load %arg2[%c0, %c0_2] : memref<8x128xf32, #tpu.memory_space<vmem>>, vector<8x128xf32>
    %c0_3 = arith.constant 0 : index
    %c0_4 = arith.constant 0 : index
    %6 = vector.load %arg3[%c0_3, %c0_4] : memref<8x128xf32, #tpu.memory_space<vmem>>, vector<8x128xf32>
    %cst = arith.constant 0.000000e+00 : f32
    %7 = vector.broadcast %cst : f32 to vector<8x128xf32>
    %8 = arith.cmpf ogt, %6, %7 : vector<8x128xf32>
    %9 = arith.subf %5, %6 : vector<8x128xf32>
    %10 = math.absf %9 : vector<8x128xf32>
    %cst_5 = arith.constant 0.000000e+00 : f32
    %11 = vector.broadcast %cst_5 : f32 to vector<8x128xf32>
    %12 = arith.select %8, %10, %11 : vector<8x128xi1>, vector<8x128xf32>
    %c0_i32_6 = arith.constant 0 : i32
    %13 = arith.cmpi eq, %arg0, %c0_i32_6 : i32
    %14 = arith.extui %13 : i1 to i32
    %c0_i32_7 = arith.constant 0 : i32
    %15 = arith.cmpi ne, %14, %c0_i32_7 : i32
    scf.if %15 {
      %c0_15 = arith.constant 0 : index
      %c0_16 = arith.constant 0 : index
      %29 = vector.load %arg5[%c0_15, %c0_16] : memref<8x128xf32, #tpu.memory_space<vmem>>, vector<8x128xf32>
      %30 = arith.maximumf %29, %12 : vector<8x128xf32>
      %c0_17 = arith.constant 0 : index
      %c0_18 = arith.constant 0 : index
      %31 = vector.load %arg5[%c0_17, %c0_18] : memref<8x128xf32, #tpu.memory_space<vmem>>, vector<8x128xf32>
      tpu.vector_store %arg5[%c0_17, %c0_18], %30 {strides = array<i32>} : memref<8x128xf32, #tpu.memory_space<vmem>>, vector<8x128xf32>,
      %c0_19 = arith.constant 0 : index
      %c0_20 = arith.constant 0 : index
      %32 = vector.load %arg7[%c0_19, %c0_20] : memref<8x128xf32, #tpu.memory_space<vmem>>, vector<8x128xf32>
      %33 = arith.extui %8 : vector<8x128xi1> to vector<8x128xi32>
      %34 = arith.sitofp %33 : vector<8x128xi32> to vector<8x128xf32>
      %35 = arith.addf %32, %34 : vector<8x128xf32>
      %c0_21 = arith.constant 0 : index
      %c0_22 = arith.constant 0 : index
      %36 = vector.load %arg7[%c0_21, %c0_22] : memref<8x128xf32, #tpu.memory_space<vmem>>, vector<8x128xf32>
      tpu.vector_store %arg7[%c0_21, %c0_22], %35 {strides = array<i32>} : memref<8x128xf32, #tpu.memory_space<vmem>>, vector<8x128xf32>,
    } else {
    }
    %c1_i32 = arith.constant 1 : i32
    %16 = arith.cmpi eq, %arg0, %c1_i32 : i32
    %c0_i32_8 = arith.constant 0 : i32
    %17 = arith.cmpi eq, %arg1, %c0_i32_8 : i32
    %18 = arith.andi %16, %17 : i1
    %19 = arith.extui %18 : i1 to i32
    %c0_i32_9 = arith.constant 0 : i32
    %20 = arith.cmpi ne, %19, %c0_i32_9 : i32
    scf.if %20 {
      %c0_15 = arith.constant 0 : index
      %c0_16 = arith.constant 0 : index
      %29 = vector.load %arg5[%c0_15, %c0_16] : memref<8x128xf32, #tpu.memory_space<vmem>>, vector<8x128xf32>
      %30 = vector.shape_cast %29 : vector<8x128xf32> to vector<1x8x128xf32>
      %cst_17 = arith.constant dense<0xFF800000> : vector<1xf32>
      %31 = vector.multi_reduction <maximumf>, %30, %cst_17 [1, 2] : vector<1x8x128xf32> to vector<1xf32>
      %32 = vector.shape_cast %31 : vector<1xf32> to vector<1x1x1xf32>
      %33 = vector.extract %32[0, 0, 0] : f32 from vector<1x1x1xf32>
      %34 = vector.broadcast %33 : f32 to vector<1x1xf32>
      %cst_18 = arith.constant 5.000000e-02 : f32
      %35 = vector.broadcast %cst_18 : f32 to vector<1x1xf32>
      %36 = arith.mulf %35, %34 : vector<1x1xf32>
      %c0_19 = arith.constant 0 : index
      %c0_20 = arith.constant 0 : index
      %37 = vector.load %arg8[%c0_19, %c0_20] : memref<1x1xf32, #tpu.memory_space<vmem>>, vector<1x1xf32>
      tpu.vector_store %arg8[%c0_19, %c0_20], %36 {strides = array<i32>} : memref<1x1xf32, #tpu.memory_space<vmem>>, vector<1x1xf32>,
      %cst_21 = arith.constant 5.000000e-01 : f32
      %38 = vector.broadcast %cst_21 : f32 to vector<1x1xf32>
      %39 = arith.divf %38, %36 : vector<1x1xf32>
      %c0_22 = arith.constant 0 : index
      %c0_23 = arith.constant 0 : index
      %40 = vector.load %arg9[%c0_22, %c0_23] : memref<1x1xf32, #tpu.memory_space<vmem>>, vector<1x1xf32>
      tpu.vector_store %arg9[%c0_22, %c0_23], %39 {strides = array<i32>} : memref<1x1xf32, #tpu.memory_space<vmem>>, vector<1x1xf32>,
      %cst_24 = arith.constant 5.000000e-01 : f32
      %41 = vector.broadcast %cst_24 : f32 to vector<1x1xf32>
      %42 = arith.mulf %41, %36 : vector<1x1xf32>
      %c0_25 = arith.constant 0 : index
      %c0_26 = arith.constant 0 : index
      %43 = vector.load %arg10[%c0_25, %c0_26] : memref<1x1xf32, #tpu.memory_space<vmem>>, vector<1x1xf32>
      tpu.vector_store %arg10[%c0_25, %c0_26], %42 {strides = array<i32>} : memref<1x1xf32, #tpu.memory_space<vmem>>, vector<1x1xf32>,
    } else {
    }
    %c1_i32_10 = arith.constant 1 : i32
    %21 = arith.cmpi eq, %arg0, %c1_i32_10 : i32
    %22 = arith.extui %21 : i1 to i32
    %c0_i32_11 = arith.constant 0 : i32
    %23 = arith.cmpi ne, %22, %c0_i32_11 : i32
    scf.if %23 {
      %c0_15 = arith.constant 0 : index
      %c0_16 = arith.constant 0 : index
      %29 = vector.load %arg8[%c0_15, %c0_16] : memref<1x1xf32, #tpu.memory_space<vmem>>, vector<1x1xf32>
      %30 = arith.mulf %12, %12 : vector<8x128xf32>
      %c0_17 = arith.constant 0 : index
      %c0_18 = arith.constant 0 : index
      %31 = vector.load %arg9[%c0_17, %c0_18] : memref<1x1xf32, #tpu.memory_space<vmem>>, vector<1x1xf32>
      %32 = vector.broadcast %31 : vector<1x1xf32> to vector<8x128xf32>
      %33 = arith.mulf %30, %32 : vector<8x128xf32>
      %c0_19 = arith.constant 0 : index
      %c0_20 = arith.constant 0 : index
      %34 = vector.load %arg10[%c0_19, %c0_20] : memref<1x1xf32, #tpu.memory_space<vmem>>, vector<1x1xf32>
      %35 = vector.broadcast %34 : vector<1x1xf32> to vector<8x128xf32>
      %36 = arith.addf %33, %35 : vector<8x128xf32>
      %c0_21 = arith.constant 0 : index
      %c0_22 = arith.constant 0 : index
      %37 = vector.load %arg6[%c0_21, %c0_22] : memref<8x128xf32, #tpu.memory_space<vmem>>, vector<8x128xf32>
      %38 = vector.broadcast %29 : vector<1x1xf32> to vector<8x128xf32>
      %39 = arith.cmpf ogt, %12, %38 : vector<8x128xf32>
      %40 = arith.select %39, %36, %12 : vector<8x128xi1>, vector<8x128xf32>
      %41 = arith.addf %37, %40 : vector<8x128xf32>
      %c0_23 = arith.constant 0 : index
      %c0_24 = arith.constant 0 : index
      %42 = vector.load %arg6[%c0_23, %c0_24] : memref<8x128xf32, #tpu.memory_space<vmem>>, vector<8x128xf32>
      tpu.vector_store %arg6[%c0_23, %c0_24], %41 {strides = array<i32>} : memref<8x128xf32, #tpu.memory_space<vmem>>, vector<8x128xf32>,
    } else {
    }
    %c1_i32_12 = arith.constant 1 : i32
    %24 = arith.cmpi eq, %arg0, %c1_i32_12 : i32
    %c0_i32_13 = arith.constant 0 : i32
    %25 = arith.cmpi eq, %arg1, %c0_i32_13 : i32
    %26 = arith.andi %24, %25 : i1
    %27 = arith.extui %26 : i1 to i32
    %c0_i32_14 = arith.constant 0 : i32
    %28 = arith.cmpi ne, %27, %c0_i32_14 : i32
    scf.if %28 {
      %c0_15 = arith.constant 0 : index
      %c0_16 = arith.constant 0 : index
      %29 = vector.load %arg6[%c0_15, %c0_16] : memref<8x128xf32, #tpu.memory_space<vmem>>, vector<8x128xf32>
      %30 = vector.shape_cast %29 : vector<8x128xf32> to vector<1x8x128xf32>
      %cst_17 = arith.constant dense<0.000000e+00> : vector<1xf32>
      %31 = vector.multi_reduction <add>, %30, %cst_17 [1, 2] : vector<1x8x128xf32> to vector<1xf32>
      %32 = vector.shape_cast %31 : vector<1xf32> to vector<1x1x1xf32>
      %33 = vector.extract %32[0, 0, 0] : f32 from vector<1x1x1xf32>
      %34 = vector.broadcast %33 : f32 to vector<1x1xf32>
      %c0_18 = arith.constant 0 : index
      %c0_19 = arith.constant 0 : index
      %35 = vector.load %arg7[%c0_18, %c0_19] : memref<8x128xf32, #tpu.memory_space<vmem>>, vector<8x128xf32>
      %36 = vector.shape_cast %35 : vector<8x128xf32> to vector<1x8x128xf32>
      %cst_20 = arith.constant dense<0.000000e+00> : vector<1xf32>
      %37 = vector.multi_reduction <add>, %36, %cst_20 [1, 2] : vector<1x8x128xf32> to vector<1xf32>
      %38 = vector.shape_cast %37 : vector<1xf32> to vector<1x1x1xf32>
      %39 = vector.extract %38[0, 0, 0] : f32 from vector<1x1x1xf32>
      %40 = vector.broadcast %39 : f32 to vector<1x1xf32>
      %41 = arith.divf %34, %40 : vector<1x1xf32>
      %c0_21 = arith.constant 0 : index
      %c0_22 = arith.constant 0 : index
      %42 = vector.load %arg4[%c0_21, %c0_22] : memref<1x1xf32, #tpu.memory_space<vmem>>, vector<1x1xf32>
      tpu.vector_store %arg4[%c0_21, %c0_22], %41 {strides = array<i32>} : memref<1x1xf32, #tpu.memory_space<vmem>>, vector<1x1xf32>,
    } else {
    }
    return
  }
  func.func @transform_0(%arg0: i32, %arg1: i32) -> (i32, i32) {
    %c0_i32 = arith.constant 0 : i32
    %c0_i32_0 = arith.constant 0 : i32
    return %arg1, %c0_i32 : i32, i32
  }
  func.func @transform_1(%arg0: i32, %arg1: i32) -> (i32, i32) {
    %c0_i32 = arith.constant 0 : i32
    %c0_i32_0 = arith.constant 0 : i32
    return %arg1, %c0_i32 : i32, i32
  }
  func.func @transform_2(%arg0: i32, %arg1: i32) -> (i32, i32) {
    %c0_i32 = arith.constant 0 : i32
    %c0_i32_0 = arith.constant 0 : i32
    %c0_i32_1 = arith.constant 0 : i32
    return %c0_i32, %c0_i32_0 : i32, i32
  }
}

</mosaic_0001>

<llo_original>
// kernel: tpu_custom_call.1
$region0: #{tpu_custom_call.1}
  #allocation0 [shape = 'u32[]', space=smem, size = 0x4, offset = 0x4, fixed_abs, tag = 'smem constant byte address 0x4 - core index']
  #allocation1 [shape = 'u32[144,128]{1,0:T(1,128)}', space=vmem, size = 0x12000, scoped, tag = 'internal scratch']
  #allocation2 [shape = 'f32[8,128]{1,0:T(8,128)}', space=vmem, size = 0x1000, scoped, tag = 'scratch operand']
  #allocation3 [shape = 'f32[8,128]{1,0:T(8,128)}', space=vmem, size = 0x1000, scoped, tag = 'scratch operand']
  #allocation4 [shape = 'f32[8,128]{1,0:T(8,128)}', space=vmem, size = 0x1000, scoped, tag = 'scratch operand']
  #allocation5 [shape = 'f32[1,1]{1,0:T(1,128)}', space=vmem, size = 0x200, scoped, tag = 'scratch operand']
  #allocation6 [shape = 'f32[1,1]{1,0:T(1,128)}', space=vmem, size = 0x200, scoped, tag = 'scratch operand']
  #allocation7 [shape = 'f32[1,1]{1,0:T(1,128)}', space=vmem, size = 0x200, scoped, tag = 'scratch operand']
  %s0 = inlined_call_operand.hbm [shape: f32[8,128], index: 0, kind: input, shape index: {}]
  %s1 = inlined_call_operand.hbm [shape: f32[8,128], index: 1, kind: input, shape index: {}]
  %s2 = inlined_call_operand.hbm [shape: f32[1,1], index: 2, kind: output, shape index: {}]
  %s3 = sld [smem:[#allocation0]]
  $region69: #{tpu_custom_call.1} parent=0
    _
  %s5 = ssub.s32 1, %s3
  %s6 = scalar_select 0, %s5, %s3
  $region1: #{tpu_custom_call.1} parent=0
    #allocation8 [shape = 'u8[4096]{0}', space=vmem, size = 0x1000, scoped, tag = 'input window, operand 0, single buffered']
    #allocation9 [shape = 's32[2]{0}', space=sflag, size = 0x8, scoped, tag = 'scoped memory for tpu_custom_call.1']
    #allocation10 [shape = 's32[2]{0}', space=sflag, size = 0x8, scoped, tag = 'scoped memory for tpu_custom_call.1']
    #allocation11 [shape = 'u8[4096]{0}', space=vmem, size = 0x1000, scoped, tag = 'input window, operand 1, single buffered']
    #allocation12 [shape = 's32[1]{0}', space=sflag, size = 0x4, scoped, tag = 'scoped memory for tpu_custom_call.1']
    #allocation13 [shape = 'u8[512]{0}', space=vmem, size = 0x400, scoped, tag = 'output window, operand 0, single buffered']
    %7 = vsyncpa [#allocation9], 0
    %8 = vsyncpa [#allocation12], 0
    %9 = vsyncpa [#allocation10], 0
    loop: start=0, step=1, limit=4
    $region2: #{tpu_custom_call.1} parent=1 // loop_pre_header
      _
    $region3: #{tpu_custom_call.1} parent=1 // loop_header
      %s11 = sphi 0, %s15
      %p12 = scmp.ge.s32.totalorder %s11, 4
      %s18 = sphi 0, %s30
      %s19 = sphi 0, %s26
      %s20 = sphi 0, %s18
      %s21 = sphi 0, %s19
      %s22 = sphi 0, %s20
      %s23 = sphi 0, %s21
      %s33 = sphi 0, %s35
      %s36 = sphi 0, %s33
      %s37 = sphi 0, %s36
      %s53 = sphi 0, %s37
      %s59 = sphi 0, %s61
      %s62 = sphi 0, %s59
      %s63 = sphi 0, %s62
      %s79 = sphi 0, %s63
      %s83 = sphi 0, %s83
      %s85 = sphi 0, %s83
      %s86 = sphi 0, %s85
      %s100 = sphi 0, %s86
    $region4: #{tpu_custom_call.1} parent=1 // loop_header_branch
      %14 = sbr.rel (%p12) target = $region8
    $region5: #{tpu_custom_call.1} parent=1 // loop_body
      %s16 = ssub.s32 %s11, 1
      %s17 = ssub.s32 %s11, 2
      %s24 = sadd.s32 1, %s19
      %p25 = scmp.ge.s32.totalorder %s24, 1
      %s26 = scalar_select %p25, 0, %s24
      %s27 = sadd.s32 1, %s18
      %s28 = scalar_select %p25, %s27, %s18
      %p29 = scmp.ge.s32.totalorder %s28, 2
      %s30 = scalar_select %p29, 0, %s28
      %s31 = ssub.s32 %s19, %s26
      %p32 = scmp.eq.s32.totalorder %s31, 0
      %s34 = sadd.s32 %s33, 1
      %s35 = scalar_select %p32, %s33, %s34
      %p38 = pneg %p32
      %p39 = scmp.eq.s32.totalorder %s11, 1
      %p40 = por %p38, %p39
      %p41 = scmp.ne.s32.totalorder %s33, %s36
      %p42 = scmp.eq.s32.totalorder %s11, 0
      %p43 = por %p41, %p42
      %p44 = scmp.ne.s32.totalorder %s33, %s36
      %p45 = scmp.eq.s32.totalorder %s16, 1
      %p46 = por %p44, %p45
      %p47 = scmp.ne.s32.totalorder %s36, %s37
      %p48 = scmp.eq.s32.totalorder %s16, 0
      %p49 = por %p47, %p48
      %p50 = scmp.ne.s32.totalorder %s36, %s37
      %p51 = scmp.eq.s32.totalorder %s17, 1
      %p52 = por %p50, %p51
      %p54 = scmp.ne.s32.totalorder %s37, %s53
      %p55 = scmp.eq.s32.totalorder %s17, 0
      %p56 = por %p54, %p55
      %s57 = ssub.s32 %s19, %s26
      %p58 = scmp.eq.s32.totalorder %s57, 0
      %s60 = sadd.s32 %s59, 1
      %s61 = scalar_select %p58, %s59, %s60
      %p64 = pneg %p58
      %p65 = scmp.eq.s32.totalorder %s11, 1
      %p66 = por %p64, %p65
      %p67 = scmp.ne.s32.totalorder %s59, %s62
      %p68 = scmp.eq.s32.totalorder %s11, 0
      %p69 = por %p67, %p68
      %p70 = scmp.ne.s32.totalorder %s59, %s62
      %p71 = scmp.eq.s32.totalorder %s16, 1
      %p72 = por %p70, %p71
      %p73 = scmp.ne.s32.totalorder %s62, %s63
      %p74 = scmp.eq.s32.totalorder %s16, 0
      %p75 = por %p73, %p74
      %p76 = scmp.ne.s32.totalorder %s62, %s63
      %p77 = scmp.eq.s32.totalorder %s17, 1
      %p78 = por %p76, %p77
      %p80 = scmp.ne.s32.totalorder %s63, %s79
      %p81 = scmp.eq.s32.totalorder %s17, 0
      %p82 = por %p80, %p81
      %s84 = sadd.s32 %s83, 1
      %p87 = scmp.eq.s32.totalorder %s11, 1
      %p88 = scmp.ne.s32.totalorder %s83, %s85
      %p89 = scmp.eq.s32.totalorder %s11, 0
      %p90 = por %p88, %p89
      %p91 = scmp.ne.s32.totalorder %s83, %s85
      %p92 = scmp.eq.s32.totalorder %s16, 1
      %p93 = por %p91, %p92
      %p94 = scmp.ne.s32.totalorder %s85, %s86
      %p95 = scmp.eq.s32.totalorder %s16, 0
      %p96 = por %p94, %p95
      %p97 = scmp.ne.s32.totalorder %s85, %s86
      %p98 = scmp.eq.s32.totalorder %s17, 1
      %p99 = por %p97, %p98
      %p101 = scmp.ne.s32.totalorder %s86, %s100
      %p102 = scmp.eq.s32.totalorder %s17, 0
      %p103 = por %p101, %p102
      %p104 = scmp.le.s32.totalorder 1, %s11
      %p105 = scmp.lt.s32.totalorder %s11, 3
      %p106 = pnand %p104, %p105
      %p107 = pneg %p106
      // Predicated region
      $region9: #{tpu_custom_call.1} parent=5 // pred_check
        _
      $region10: #{tpu_custom_call.1} parent=5 // pred_check_branch
        %109 = sbr.rel (%p106) target = $region12
      $region11: #{tpu_custom_call.1} parent=5 // pred_region
        %s110 = ssub.s32 %s11, 1
        // Predicated region
        $region13: #{tpu_custom_call.1} parent=11 // pred_check
          %p111 = pneg %p49
        $region14: #{tpu_custom_call.1} parent=11 // pred_check_branch
          %113 = sbr.rel (%p111) target = $region16
        $region15: #{tpu_custom_call.1} parent=11 // pred_region
          %s115 = ssub.s32 128, 128
          %116 = vsyncadd [#allocation9], %s115
          %s117 = smul.addr %s21, 128
          %s118 = scalar_lea.hbm %s0, %s117
          %s120 = sshll.u32 [#allocation8], 4
          %s121 = int_to_ptr.vmem [resolvable:$true] %s120
          %123 = dma.hbm_to_vmem [thread:$0]  %s118, 128, %s121, [#allocation9]
        $region16: #{tpu_custom_call.1} parent=11 // pred_fallthru
          _
        // Predicated region
        $region17: #{tpu_custom_call.1} parent=11 // pred_check
          %p124 = pneg %p75
        $region18: #{tpu_custom_call.1} parent=11 // pred_check_branch
          %126 = sbr.rel (%p124) target = $region20
        $region19: #{tpu_custom_call.1} parent=11 // pred_region
          %s128 = ssub.s32 128, 128
          %129 = vsyncadd [#allocation12], %s128
          %s130 = smul.addr %s21, 128
          %s131 = scalar_lea.hbm %s1, %s130
          %s133 = sshll.u32 [#allocation11], 4
          %s134 = int_to_ptr.vmem [resolvable:$true] %s133
          %136 = dma.hbm_to_vmem [thread:$0]  %s131, 128, %s134, [#allocation12]
        $region20: #{tpu_custom_call.1} parent=11 // pred_fallthru
          _
      $region12: #{tpu_custom_call.1} parent=5 // pred_fallthru
        _
      %p137 = scmp.lt.s32.totalorder %s11, 2
      // Predicated region
      $region21: #{tpu_custom_call.1} parent=5 // pred_check
        %p138 = pneg %p137
      $region22: #{tpu_custom_call.1} parent=5 // pred_check_branch
        %140 = sbr.rel (%p138) target = $region24
      $region23: #{tpu_custom_call.1} parent=5 // pred_region
        _
      $region24: #{tpu_custom_call.1} parent=5 // pred_fallthru
        _
      %p141 = scmp.le.s32.totalorder 1, %s11
      %p142 = scmp.lt.s32.totalorder %s11, 3
      %p143 = pnand %p141, %p142
      %p144 = pneg %p143
      // Predicated region
      $region25: #{tpu_custom_call.1} parent=5 // pred_check
        _
      $region26: #{tpu_custom_call.1} parent=5 // pred_check_branch
        %146 = sbr.rel (%p143) target = $region28
      $region27: #{tpu_custom_call.1} parent=5 // pred_region
        %s147 = ssub.s32 %s11, 1
        // Predicated region
        $region29: #{tpu_custom_call.1} parent=27 // pred_check
          %p148 = pneg %p49
        $region30: #{tpu_custom_call.1} parent=27 // pred_check_branch
          %150 = sbr.rel (%p148) target = $region32
        $region31: #{tpu_custom_call.1} parent=27 // pred_region
          %151 = dma.done [#allocation9], 128
        $region32: #{tpu_custom_call.1} parent=27 // pred_fallthru
          _
        // Predicated region
        $region33: #{tpu_custom_call.1} parent=27 // pred_check
          %p152 = pneg %p75
        $region34: #{tpu_custom_call.1} parent=27 // pred_check_branch
          %154 = sbr.rel (%p152) target = $region36
        $region35: #{tpu_custom_call.1} parent=27 // pred_region
          %155 = dma.done [#allocation12], 128
        $region36: #{tpu_custom_call.1} parent=27 // pred_fallthru
          _
        %p156 = pneg %p49
        %p157 = pneg %p46
        %p158 = pneg %p75
        %p159 = pneg %p72
        %p160 = pneg %p96
        %p161 = pneg %p93
        %p162 = scmp.eq.s32.totalorder %s20, 0
        %p163 = scmp.eq.s32.totalorder %s21, 0
        %p164 = pnand %p162, %p163
        %p165 = pneg %p164
        // Predicated region
        $region37: #{tpu_custom_call.1} parent=27 // pred_check
          _
        $region38: #{tpu_custom_call.1} parent=27 // pred_check_branch
          %167 = sbr.rel (%p164) target = $region40
        $region39: #{tpu_custom_call.1} parent=27 // pred_region
          %168 = vst [vmem:[#allocation2] sm:$0xff] 0.0
          %169 = vst [vmem:[#allocation3] sm:$0xff] 0.0
          %170 = vst [vmem:[#allocation4] sm:$0xff] 0.0
          %vm171 = vcmask 0
          %172 = vst.msk [vmem:[#allocation13] sm:$0x1] %vm171, 0.0
        $region40: #{tpu_custom_call.1} parent=27 // pred_fallthru
          _
        %v173 = vld [vmem:[#allocation8] sm:$0xff]
        %v174 = vld [vmem:[#allocation11] sm:$0xff]
        %vm175 = vcmp.gt.f32.partialorder %v174, 0.0
        %v176 = vsub.f32 %v173, %v174
        %v177 = vand.u32 2147483647, %v176
        %v178 = vsel %vm175, %v177, 0.0
        // Predicated region
        $region41: #{tpu_custom_call.1} parent=27 // pred_check
          %p179 = pneg %p162
        $region42: #{tpu_custom_call.1} parent=27 // pred_check_branch
          %181 = sbr.rel (%p179) target = $region44
        $region43: #{tpu_custom_call.1} parent=27 // pred_region
          %v182 = vld [vmem:[#allocation2] sm:$0xff]
          %v183 = vmax.f32 %v182, %v178
          %184 = vst [vmem:[#allocation2] sm:$0xff] %v183
          %v185 = vld [vmem:[#allocation4] sm:$0xff]
          %v186 = vsel %vm175, 1, 0
          %v187 = vcvt.s32.f32 %v186
          %v188 = vadd.f32 %v185, %v187
          %189 = vst [vmem:[#allocation4] sm:$0xff] %v188
        $region44: #{tpu_custom_call.1} parent=27 // pred_fallthru
          _
        %p190 = scmp.eq.s32.totalorder %s20, 1
        %p191 = pnand %p190, %p163
        %p192 = pneg %p191
        // Predicated region
        $region45: #{tpu_custom_call.1} parent=27 // pred_check
          _
        $region46: #{tpu_custom_call.1} parent=27 // pred_check_branch
          %194 = sbr.rel (%p191) target = $region48
        $region47: #{tpu_custom_call.1} parent=27 // pred_region
          %v195 = vld [vmem:[#allocation2] sm:$0xff]
          %196 = vmax.xlane.f32.xlu0 %v195
          %v197 = vpop.xlane.xlu0 %196
          %v198 = vrot.slane %v197, 4
          %v199 = vmax.f32 %v197, %v198
          %v200 = vrot.slane %v199, 2
          %v201 = vmax.f32 %v199, %v200
          %v202 = vrot.slane %v201, 1
          %v203 = vmax.f32 %v201, %v202
          %s204 = vtos %v203
          %v205 = vstv %s204
          %v206 = vmul.f32 %v205, 0.05
          %vm207 = vcmask 0
          %208 = vst.msk [vmem:[#allocation5] sm:$0x1] %vm207, %v206
          %v209 = vrcp.pop %v206
          %v210 = vmul.f32 0.5, %v209
          %211 = vst.msk [vmem:[#allocation6] sm:$0x1] %vm207, %v210
          %v212 = vmul.f32 %v206, 0.5
          %213 = vst.msk [vmem:[#allocation7] sm:$0x1] %vm207, %v212
        $region48: #{tpu_custom_call.1} parent=27 // pred_fallthru
          _
        // Predicated region
        $region49: #{tpu_custom_call.1} parent=27 // pred_check
          %p214 = pneg %p190
        $region50: #{tpu_custom_call.1} parent=27 // pred_check_branch
          %216 = sbr.rel (%p214) target = $region52
        $region51: #{tpu_custom_call.1} parent=27 // pred_region
          %v217 = vld [vmem:[#allocation5] sm:$0x1]
          %v218 = vmul.f32 %v178, %v178
          %v219 = vld [vmem:[#allocation6] sm:$0x1]
          %v221 = vlaneseq
          %v222 = vshrl.u32 %v221, 7
          %v223 = vsub.s32 0, %v222
          %v224 = vrot.slane %v219, %v223
          %225 = vset.pattern.permute.xlu0 0
          %226 = vperm.xlu0 %225, %v224
          %v227 = vpop.permute.xlu0 %226
          %v229 = vmul.f32 %v218, %v227
          %v230 = vld [vmem:[#allocation7] sm:$0x1]
          %v232 = vlaneseq
          %v233 = vshrl.u32 %v232, 7
          %v234 = vsub.s32 0, %v233
          %v235 = vrot.slane %v230, %v234
          %236 = vset.pattern.permute.xlu0 0
          %237 = vperm.xlu0 %236, %v235
          %v238 = vpop.permute.xlu0 %237
          %v240 = vadd.f32 %v229, %v238
          %v241 = vld [vmem:[#allocation3] sm:$0xff]
          %v243 = vlaneseq
          %v244 = vshrl.u32 %v243, 7
          %v245 = vsub.s32 0, %v244
          %v246 = vrot.slane %v217, %v245
          %247 = vset.pattern.permute.xlu0 0
          %248 = vperm.xlu0 %247, %v246
          %v249 = vpop.permute.xlu0 %248
          %vm251 = vcmp.gt.f32.partialorder %v178, %v249
          %v252 = vsel %vm251, %v240, %v178
          %v253 = vadd.f32 %v241, %v252
          %254 = vst [vmem:[#allocation3] sm:$0xff] %v253
        $region52: #{tpu_custom_call.1} parent=27 // pred_fallthru
          _
        // Predicated region
        $region53: #{tpu_custom_call.1} parent=27 // pred_check
          _
        $region54: #{tpu_custom_call.1} parent=27 // pred_check_branch
          %256 = sbr.rel (%p191) target = $region56
        $region55: #{tpu_custom_call.1} parent=27 // pred_region
          %v257 = vld [vmem:[#allocation3] sm:$0xff]
          %258 = vadd.xlane.f32.xlu0 %v257
          %v259 = vpop.xlane.xlu0 %258
          %v260 = vrot.slane %v259, 4
          %v261 = vadd.f32 %v259, %v260
          %v262 = vrot.slane %v261, 2
          %v263 = vadd.f32 %v261, %v262
          %v264 = vrot.slane %v263, 1
          %v265 = vadd.f32 %v263, %v264
          %s266 = vtos %v265
          %v267 = vstv %s266
          %v268 = vld [vmem:[#allocation4] sm:$0xff]
          %269 = vadd.xlane.f32.xlu0 %v268
          %v270 = vpop.xlane.xlu0 %269
          %v271 = vrot.slane %v270, 4
          %v272 = vadd.f32 %v270, %v271
          %v273 = vrot.slane %v272, 2
          %v274 = vadd.f32 %v272, %v273
          %v275 = vrot.slane %v274, 1
          %v276 = vadd.f32 %v274, %v275
          %s277 = vtos %v276
          %v278 = vstv %s277
          %v279 = vrcp.pop %v278
          %v280 = vmul.f32 %v267, %v279
          %vm281 = vcmask 0
          %282 = vst.msk [vmem:[#allocation13] sm:$0x1] %vm281, %v280
        $region56: #{tpu_custom_call.1} parent=27 // pred_fallthru
          _
        // Predicated region
        $region57: #{tpu_custom_call.1} parent=27 // pred_check
          %p283 = pneg %p93
        $region58: #{tpu_custom_call.1} parent=27 // pred_check_branch
          %285 = sbr.rel (%p283) target = $region60
        $region59: #{tpu_custom_call.1} parent=27 // pred_region
          %s287 = ssub.s32 16, 16
          %288 = vsyncadd [#allocation10], %s287
          %s290 = sshll.u32 [#allocation13], 4
          %s291 = int_to_ptr.vmem [resolvable:$true] %s290
          %293 = dma.vmem_to_hbm [thread:$0]  %s291, 16, %s2, [#allocation10]
        $region60: #{tpu_custom_call.1} parent=27 // pred_fallthru
          _
        // Predicated region
        $region61: #{tpu_custom_call.1} parent=27 // pred_check
          %p294 = pneg %p93
        $region62: #{tpu_custom_call.1} parent=27 // pred_check_branch
          %296 = sbr.rel (%p294) target = $region64
        $region63: #{tpu_custom_call.1} parent=27 // pred_region
          %297 = dma.done [#allocation10], 16
        $region64: #{tpu_custom_call.1} parent=27 // pred_fallthru
          _
      $region28: #{tpu_custom_call.1} parent=5 // pred_fallthru
        _
      %p298 = scmp.le.s32.totalorder 2, %s11
      // Predicated region
      $region65: #{tpu_custom_call.1} parent=5 // pred_check
        %p299 = pneg %p298
      $region66: #{tpu_custom_call.1} parent=5 // pred_check_branch
        %301 = sbr.rel (%p299) target = $region68
      $region67: #{tpu_custom_call.1} parent=5 // pred_region
        %s302 = ssub.s32 %s11, 2
      $region68: #{tpu_custom_call.1} parent=5 // pred_fallthru
        _
    $region6: #{tpu_custom_call.1} parent=1 // loop_footer
      %s15 = sadd.s32 1, %s11
    $region7: #{tpu_custom_call.1} parent=1 // loop_footer_branch
      %10 = sbr.rel target = $region3
    $region8: #{tpu_custom_call.1} parent=1 // loop_exit
      _
    %303 = vsyncpa [#allocation9], 1
    %s304 = scalar_lea.sflag [#allocation9], 1
    %305 = vsyncpa %s304, 1
    %306 = vsyncpa [#allocation12], 1
    %307 = vsyncpa [#allocation10], 1
    %s308 = scalar_lea.sflag [#allocation10], 1
    %309 = vsyncpa %s308, 1

</llo_original>
